<compile_context>
chip_gen: v7x
topology: tpu7x:2x2x1
jax: 0.10.0
libtpu: 0.0.40
codegen_flags: <defaults>
</compile_context>

<pallas_src>
import jax
import jax.numpy as jnp
from jax.experimental import pallas as pl
from jax.experimental.pallas import tpu as pltpu


def _round_up(x, m):
    return ((x + m - 1) // m) * m


def _choose_tn(ba, c, itemsize=4, vmem_input_budget=8 * 1024 * 1024):
    """Pick the anchor (lane) tile: multiple of 128, sized to a conservative
    double-buffered-input VMEM budget that is safe on v5e/v6e/v7x."""
    c_pad = max(8, _round_up(c, 8))                 # sublane padding in VMEM
    per_col = 2 * 2 * c_pad * itemsize              # 2 inputs x 2 pipeline buffers
    tn = vmem_input_budget // per_col
    tn = min(tn, 8192, _round_up(ba, 128))
    if ba >= 2 * 128:
        # keep at least 2 grid steps so the axis can shard across v7x's 2 TCs
        tn = min(tn, _round_up(ba, 256) // 2)
    tn = max(128, (tn // 128) * 128)
    return int(tn)


def _wce_kernel(x_ref, t_ref, w_ref, o_ref):
    # x_ref / t_ref: (C, TN)  -- classes on sublanes, anchors on lanes
    # w_ref / o_ref: (1, TN)  -- lane-dense weights / output
    x = x_ref[...].astype(jnp.float32)
    t = t_ref[...].astype(jnp.float32)
    w = w_ref[...].astype(jnp.float32)

    # numerically-stable logsumexp over the class (sublane) axis
    m = jnp.max(x, axis=0, keepdims=True)                               # (1, TN)
    lse = m + jnp.log(jnp.sum(jnp.exp(x - m), axis=0, keepdims=True))   # (1, TN)

    # one-hot gather: exact for 0/1 targets (module interface is one-hot)
    picked = jnp.sum(x * t, axis=0, keepdims=True)                      # (1, TN)

    o_ref[...] = (lse - picked) * w                                     # (1, TN)


def weighted_cross_entropy_loss(logits, target, weights, *, tn=None):
    """logits, target: (B, A, C); weights: (B, A) -> loss (B, A) float32."""
    B, A, C = logits.shape
    BA = B * A
    if tn is None:
        tn = _choose_tn(BA, C)
    ba_pad = _round_up(BA, tn)

    # Relayout: anchors -> lanes, classes -> sublanes (lane-dense for small C).
    xt = jnp.transpose(logits.reshape(BA, C)).astype(jnp.float32)   # (C, BA)
    tt = jnp.transpose(target.reshape(BA, C)).astype(jnp.float32)   # (C, BA)
    w2 = weights.reshape(1, BA).astype(jnp.float32)                 # (1, BA)

    pad = ba_pad - BA
    if pad:
        # zero padding: loss on padded anchors is finite and sliced off below
        xt = jnp.pad(xt, ((0, 0), (0, pad)))
        tt = jnp.pad(tt, ((0, 0), (0, pad)))
        w2 = jnp.pad(w2, ((0, 0), (0, pad)))

    out = pl.pallas_call(
        _wce_kernel,
        out_shape=jax.ShapeDtypeStruct((1, ba_pad), jnp.float32),
        grid_spec=pltpu.PrefetchScalarGridSpec(
            num_scalar_prefetch=0,
            grid=(ba_pad // tn,),
            in_specs=[
                pl.BlockSpec((C, tn), lambda i: (0, i)),
                pl.BlockSpec((C, tn), lambda i: (0, i)),
                pl.BlockSpec((1, tn), lambda i: (0, i)),
            ],
            out_specs=pl.BlockSpec((1, tn), lambda i: (0, i)),
        ),
        compiler_params=pltpu.CompilerParams(
            dimension_semantics=("parallel",),
            vmem_limit_bytes=32 * 1024 * 1024,   # safe on v5e/v6e/v7x
        ),
    )(xt, tt, w2)

    return out[0, :BA].reshape(B, A)


def _reference(logits, target, weights):
    # pure-JAX reference of the PyTorch forward
    t_idx = jnp.argmax(target, axis=-1)
    lse = jax.nn.logsumexp(logits.astype(jnp.float32), axis=-1)
    picked = jnp.take_along_axis(
        logits.astype(jnp.float32), t_idx[..., None], axis=-1)[..., 0]
    return (lse - picked) * weights.astype(jnp.float32)


if __name__ == "__main__":
    key = jax.random.PRNGKey(0)
    k1, k2, k3 = jax.random.split(key, 3)

    B, A, C = 2, 16, 4  # batch, anchors, classes (small detection-style case)

    logits = jax.random.normal(k1, (B, A, C), dtype=jnp.float32)
    target_idx = jax.random.randint(k2, (B, A), 0, C)
    target = jax.nn.one_hot(target_idx, C, dtype=jnp.float32)
    weights = jax.random.uniform(k3, (B, A), dtype=jnp.float32)

    loss = weighted_cross_entropy_loss(logits, target, weights)
    jax.block_until_ready(loss)

    ref = _reference(logits, target, weights)
    assert loss.shape == (B, A)
    assert jnp.allclose(loss, ref, atol=1e-5, rtol=1e-5), (
        f"max err {jnp.max(jnp.abs(loss - ref))}")

    print("KERNEL_OK")
</pallas_src>

<mosaic_0001>
module attributes {stable_mosaic.version = 11 : i64} {
  func.func @_wce_kernel(%arg0: i32, %arg1: memref<4x128xf32, #tpu.memory_space<vmem>>, %arg2: memref<4x128xf32, #tpu.memory_space<vmem>>, %arg3: memref<1x128xf32, #tpu.memory_space<vmem>>, %arg4: memref<1x128xf32, #tpu.memory_space<vmem>>) attributes {dimension_semantics = [#tpu.dimension_semantics<parallel>], iteration_bounds = array<i64: 1>, scalar_prefetch = 0 : i64, scratch_operands = 0 : i64, tpu.core_type = #tpu.core_type<tc>, window_params = [{transform_indices = @transform_0, window_bounds = array<i64: 4, 128>}, {transform_indices = @transform_1, window_bounds = array<i64: 4, 128>}, {transform_indices = @transform_2, window_bounds = array<i64: 1, 128>}, {transform_indices = @transform_3, window_bounds = array<i64: 1, 128>}]} {
    %c0 = arith.constant 0 : index
    %c0_0 = arith.constant 0 : index
    %0 = vector.load %arg1[%c0, %c0_0] : memref<4x128xf32, #tpu.memory_space<vmem>>, vector<4x128xf32>
    %c0_1 = arith.constant 0 : index
    %c0_2 = arith.constant 0 : index
    %1 = vector.load %arg2[%c0_1, %c0_2] : memref<4x128xf32, #tpu.memory_space<vmem>>, vector<4x128xf32>
    %c0_3 = arith.constant 0 : index
    %c0_4 = arith.constant 0 : index
    %2 = vector.load %arg3[%c0_3, %c0_4] : memref<1x128xf32, #tpu.memory_space<vmem>>, vector<1x128xf32>
    %cst = arith.constant dense<0xFF800000> : vector<128xf32>
    %3 = vector.multi_reduction <maximumf>, %0, %cst [0] : vector<4x128xf32> to vector<128xf32>
    %4 = vector.shape_cast %3 : vector<128xf32> to vector<1x128xf32>
    %5 = vector.broadcast %4 : vector<1x128xf32> to vector<4x128xf32>
    %6 = arith.subf %0, %5 : vector<4x128xf32>
    %7 = math.exp %6 : vector<4x128xf32>
    %cst_5 = arith.constant dense<0.000000e+00> : vector<128xf32>
    %8 = vector.multi_reduction <add>, %7, %cst_5 [0] : vector<4x128xf32> to vector<128xf32>
    %9 = vector.shape_cast %8 : vector<128xf32> to vector<1x128xf32>
    %10 = math.log %9 : vector<1x128xf32>
    %11 = arith.addf %4, %10 : vector<1x128xf32>
    %12 = arith.mulf %0, %1 : vector<4x128xf32>
    %cst_6 = arith.constant dense<0.000000e+00> : vector<128xf32>
    %13 = vector.multi_reduction <add>, %12, %cst_6 [0] : vector<4x128xf32> to vector<128xf32>
    %14 = vector.shape_cast %13 : vector<128xf32> to vector<1x128xf32>
    %15 = arith.subf %11, %14 : vector<1x128xf32>
    %16 = arith.mulf %15, %2 : vector<1x128xf32>
    %c0_7 = arith.constant 0 : index
    %c0_8 = arith.constant 0 : index
    %17 = vector.load %arg4[%c0_7, %c0_8] : memref<1x128xf32, #tpu.memory_space<vmem>>, vector<1x128xf32>
    tpu.vector_store %arg4[%c0_7, %c0_8], %16 {strides = array<i32>} : memref<1x128xf32, #tpu.memory_space<vmem>>, vector<1x128xf32>,
    return
  }
  func.func @transform_0(%arg0: i32) -> (i32, i32) {
    %c0_i32 = arith.constant 0 : i32
    %c0_i32_0 = arith.constant 0 : i32
    return %c0_i32, %arg0 : i32, i32
  }
  func.func @transform_1(%arg0: i32) -> (i32, i32) {
    %c0_i32 = arith.constant 0 : i32
    %c0_i32_0 = arith.constant 0 : i32
    return %c0_i32, %arg0 : i32, i32
  }
  func.func @transform_2(%arg0: i32) -> (i32, i32) {
    %c0_i32 = arith.constant 0 : i32
    %c0_i32_0 = arith.constant 0 : i32
    return %c0_i32, %arg0 : i32, i32
  }
  func.func @transform_3(%arg0: i32) -> (i32, i32) {
    %c0_i32 = arith.constant 0 : i32
    %c0_i32_0 = arith.constant 0 : i32
    return %c0_i32, %arg0 : i32, i32
  }
}

</mosaic_0001>

<llo_original>
// kernel: tpu_custom_call.1
$region0: #{tpu_custom_call.1}
  #allocation0 [shape = 'u32[]', space=smem, size = 0x4, offset = 0x4, fixed_abs, tag = 'smem constant byte address 0x4 - core index']
  #allocation1 [shape = 'u32[144,128]{1,0:T(1,128)}', space=vmem, size = 0x12000, scoped, tag = 'internal scratch']
  %s0 = inlined_call_operand.hbm [shape: f32[4,128], index: 0, kind: input, shape index: {}]
  %s1 = inlined_call_operand.hbm [shape: f32[4,128], index: 1, kind: input, shape index: {}]
  %s2 = inlined_call_operand.vmem [shape: f32[1,128], index: 2, kind: input, shape index: {}]
  %s3 = inlined_call_operand.hbm [shape: f32[1,128], index: 3, kind: output, shape index: {}]
  %s4 = sld [smem:[#allocation0]]
  $region30: #{tpu_custom_call.1} parent=0
    _
  %s6 = ssub.s32 1, %s4
  %s7 = scalar_select 0, %s6, %s4
  $region1: #{tpu_custom_call.1} parent=0
    #allocation2 [shape = 'u8[2048]{0}', space=vmem, size = 0x800, scoped, tag = 'input window, operand 0, single buffered']
    #allocation3 [shape = 's32[1]{0}', space=sflag, size = 0x4, scoped, tag = 'scoped memory for tpu_custom_call.1']
    #allocation4 [shape = 's32[1]{0}', space=sflag, size = 0x4, scoped, tag = 'scoped memory for tpu_custom_call.1']
    #allocation5 [shape = 'u8[2048]{0}', space=vmem, size = 0x800, scoped, tag = 'input window, operand 1, single buffered']
    #allocation6 [shape = 's32[1]{0}', space=sflag, size = 0x4, scoped, tag = 'scoped memory for tpu_custom_call.1']
    #allocation7 [shape = 'u8[512]{0}', space=vmem, size = 0x400, scoped, tag = 'output window, operand 0, single buffered']
    %8 = vsyncpa [#allocation3], 0
    %9 = vsyncpa [#allocation6], 0
    %10 = vsyncpa [#allocation4], 0
    // Predicated region
    $region2: #{tpu_custom_call.1} parent=1 // pred_check
      _
    $region3: #{tpu_custom_call.1} parent=1 // pred_check_branch
      %12 = sbr.rel (0) target = $region5
    $region4: #{tpu_custom_call.1} parent=1 // pred_region
      %s14 = ssub.s32 64, 64
      %15 = vsyncadd [#allocation3], %s14
      %s17 = sshll.u32 [#allocation2], 4
      %s18 = int_to_ptr.vmem [resolvable:$true] %s17
      %20 = dma.hbm_to_vmem [thread:$0]  %s0, 64, %s18, [#allocation3]
    $region5: #{tpu_custom_call.1} parent=1 // pred_fallthru
      _
    // Predicated region
    $region6: #{tpu_custom_call.1} parent=1 // pred_check
      _
    $region7: #{tpu_custom_call.1} parent=1 // pred_check_branch
      %22 = sbr.rel (0) target = $region9
    $region8: #{tpu_custom_call.1} parent=1 // pred_region
      %s24 = ssub.s32 64, 64
      %25 = vsyncadd [#allocation6], %s24
      %s27 = sshll.u32 [#allocation5], 4
      %s28 = int_to_ptr.vmem [resolvable:$true] %s27
      %30 = dma.hbm_to_vmem [thread:$0]  %s1, 64, %s28, [#allocation6]
    $region9: #{tpu_custom_call.1} parent=1 // pred_fallthru
      _
    // Predicated region
    $region10: #{tpu_custom_call.1} parent=1 // pred_check
      _
    $region11: #{tpu_custom_call.1} parent=1 // pred_check_branch
      %32 = sbr.rel (0) target = $region13
    $region12: #{tpu_custom_call.1} parent=1 // pred_region
      _
    $region13: #{tpu_custom_call.1} parent=1 // pred_fallthru
      _
    // Predicated region
    $region14: #{tpu_custom_call.1} parent=1 // pred_check
      _
    $region15: #{tpu_custom_call.1} parent=1 // pred_check_branch
      %34 = sbr.rel (0) target = $region17
    $region16: #{tpu_custom_call.1} parent=1 // pred_region
      %35 = dma.done [#allocation3], 64
    $region17: #{tpu_custom_call.1} parent=1 // pred_fallthru
      _
    // Predicated region
    $region18: #{tpu_custom_call.1} parent=1 // pred_check
      _
    $region19: #{tpu_custom_call.1} parent=1 // pred_check_branch
      %37 = sbr.rel (0) target = $region21
    $region20: #{tpu_custom_call.1} parent=1 // pred_region
      %38 = dma.done [#allocation6], 64
    $region21: #{tpu_custom_call.1} parent=1 // pred_fallthru
      _
    %v39 = vld [vmem:[#allocation2] sm:$0xf]
    %v40 = vld [vmem:[#allocation5] sm:$0xf]
    %v41 = vld [vmem:[%s2] sm:$0x1]
    %vm42 = vcmask 1043456
    %v43 = vsel %vm42, %v39, -inf
    %v44 = vrot.slane %v43, 4
    %v45 = vmax.f32 %v43, %v44
    %v46 = vrot.slane %v45, 2
    %v47 = vmax.f32 %v45, %v46
    %v48 = vrot.slane %v47, 1
    %v49 = vmax.f32 %v47, %v48
    %v50 = vsub.f32 %v39, %v49
    %v51 = vmul.f32 %v50, 1.442695
    %v52 = vpow.pop %v51
    %v53 = vsel %vm42, %v52, 0.0
    %v54 = vrot.slane %v53, 4
    %v55 = vadd.f32 %v53, %v54
    %v56 = vrot.slane %v55, 2
    %v57 = vadd.f32 %v55, %v56
    %v58 = vrot.slane %v57, 1
    %v59 = vadd.f32 %v57, %v58
    %v60 = vlog2.pop %v59
    %v61 = vmul.f32 %v60, 0.6931472
    %v62 = vadd.f32 %v49, %v61
    %v63 = vmul.f32 %v39, %v40
    %v64 = vsel %vm42, %v63, 0.0
    %v65 = vrot.slane %v64, 4
    %v66 = vadd.f32 %v64, %v65
    %v67 = vrot.slane %v66, 2
    %v68 = vadd.f32 %v66, %v67
    %v69 = vrot.slane %v68, 1
    %v70 = vadd.f32 %v68, %v69
    %v71 = vsub.f32 %v62, %v70
    %v72 = vmul.f32 %v71, %v41
    %73 = vst [vmem:[#allocation7] sm:$0x1] %v72
    // Predicated region
    $region22: #{tpu_custom_call.1} parent=1 // pred_check
      _
    $region23: #{tpu_custom_call.1} parent=1 // pred_check_branch
      %75 = sbr.rel (0) target = $region25
    $region24: #{tpu_custom_call.1} parent=1 // pred_region
      %s77 = ssub.s32 16, 16
      %78 = vsyncadd [#allocation4], %s77
      %s80 = sshll.u32 [#allocation7], 4
      %s81 = int_to_ptr.vmem [resolvable:$true] %s80
      %83 = dma.vmem_to_hbm [thread:$0]  %s81, 16, %s3, [#allocation4]
    $region25: #{tpu_custom_call.1} parent=1 // pred_fallthru
      _
    // Predicated region
    $region26: #{tpu_custom_call.1} parent=1 // pred_check
      _
    $region27: #{tpu_custom_call.1} parent=1 // pred_check_branch
      %85 = sbr.rel (0) target = $region29
    $region28: #{tpu_custom_call.1} parent=1 // pred_region
      %86 = dma.done [#allocation4], 16
    $region29: #{tpu_custom_call.1} parent=1 // pred_fallthru
      _
    %87 = vsyncpa [#allocation3], 1
    %88 = vsyncpa [#allocation6], 1
    %89 = vsyncpa [#allocation4], 1

</llo_original>
